<compile_context>
chip_gen: v7x
topology: tpu7x:2x2x1
jax: 0.10.0
libtpu: 0.0.40
codegen_flags: <defaults>
</compile_context>

<pallas_src>
import functools

import jax
import jax.numpy as jnp
from jax import lax
from jax.experimental import pallas as pl
from jax.experimental.pallas import tpu as pltpu


def _conv_tile(xc_ref, xh_ref, w_ref, *, K, T):
    """Compute one (Cout, T) conv tile: (Cout, K*Cin) @ im2col(K*Cin, T), f32 acc.

    xc_ref: (1, Cin, B)   current tile of the edge-padded bf16 input
                          (B == L_TILE in the tiled path, or the whole padded
                          row in the single-block fallback).
    xh_ref: (1, Cin, 128) right-halo block (tiled path) / unused dummy (fallback).
    w_ref:  (Cout, K*Cin) conv weight with taps folded into the contraction
                          (row k*Cin + c == weight[o, c, k]), bf16.
    """
    cur = xc_ref[0]                                   # (Cin, B) bf16
    B = cur.shape[1]
    if B >= T + K - 1:                                # fallback: row already holds the halo
        ext = cur
    else:                                             # tiled path: append 128-col right halo
        ext = jnp.concatenate([cur, xh_ref[0]], axis=1)
    if K == 1:
        slab = ext[:, :T]
    else:
        # im2col with static slices only: tap k contributes ext[:, k : k + T].
        slab = jnp.concatenate([ext[:, k:k + T] for k in range(K)], axis=0)  # (K*Cin, T)
    return jnp.dot(w_ref[...], slab, preferred_element_type=jnp.float32)     # (Cout, T) f32


def _conv_stats_kernel(xc_ref, xh_ref, w_ref, stats_ref, *, K, T):
    # Pass 1: per-(sample, tile) partial BatchNorm statistics only.
    conv = _conv_tile(xc_ref, xh_ref, w_ref, K=K, T=T)
    psum = jnp.sum(conv, axis=1, keepdims=True)                 # (Cout, 1)
    psumsq = jnp.sum(conv * conv, axis=1, keepdims=True)        # (Cout, 1)
    stats_ref[...] = jnp.concatenate([psum, psumsq], axis=1)[None, None]   # (1,1,Cout,2)


def _conv_bn_relu_kernel(xc_ref, xh_ref, w_ref, s_ref, t_ref, o_ref, *, K, T, include_relu):
    # Pass 2: recompute the conv tile (essentially free) + fused BN affine + ReLU.
    conv = _conv_tile(xc_ref, xh_ref, w_ref, K=K, T=T)          # (Cout, T) f32
    y = conv * s_ref[...] + t_ref[...]                          # one FMA, all f32
    if include_relu:
        y = jnp.maximum(y, 0.0)
    o_ref[...] = y[None].astype(o_ref.dtype)


def conv_block_pallas(x, weight, bias, gamma, beta, *, kernel_size, eps=1e-5,
                      max_l_tile=2048, include_relu=True):
    """x: (N, Cin, L) f32; weight: (Cout, Cin, K); bias/gamma/beta: (Cout,).
    Returns (N, Cout, L) f32 in PyTorch's NCL layout (training-mode BatchNorm)."""
    del bias  # no-op under training-mode BatchNorm (the batch mean absorbs it)
    N, Cin, L = x.shape
    Cout = weight.shape[0]
    K = kernel_size
    pad_left = (K - 1) // 2            # matches PyTorch padding='same' split
    pad_right = (K - 1) - pad_left

    HALO = 128                          # right-halo block width (one lane group)
    L_TILE = None
    if L % 128 == 0 and (K - 1) <= HALO:
        for cand in (4096, 2048, 1024, 512, 256, 128):
            if cand <= max_l_tile and L % cand == 0:
                L_TILE = cand
                break
    multi = L_TILE is not None

    if multi:
        num_lt = L // L_TILE
        T = L_TILE
        right_pad = HALO - pad_left     # padded length = L + 128 (128-aligned)
    else:
        # TODO(synk): for large L not divisible by 128 a masked last tile would
        # avoid placing the whole row in one block; fine for small/odd L.
        num_lt = 1
        T = L
        right_pad = pad_right           # minimal 'same' padding, one whole-row block

    # Replicate ('edge') padding fused with the bf16 cast. Only pad_left + <=128
    # extra columns; columns past L + K - 2 are loaded but never used by the math.
    xp = jnp.pad(x, ((0, 0), (0, 0), (pad_left, right_pad)), mode="edge")
    xp = xp.astype(jnp.bfloat16)

    # Fold the K taps into the contraction: w2[o, k*Cin + c] = weight[o, c, k].
    w2 = jnp.transpose(weight, (0, 2, 1)).reshape(Cout, K * Cin).astype(jnp.bfloat16)

    if multi:
        halo = xp
        rpt = L_TILE // 128
        halo_spec = pl.BlockSpec((1, Cin, HALO), lambda n, lt: (n, 0, (lt + 1) * rpt))
        cur_spec = pl.BlockSpec((1, Cin, L_TILE), lambda n, lt: (n, 0, lt))
    else:
        halo = jnp.zeros((1, 8, 128), jnp.bfloat16)             # unused dummy
        halo_spec = pl.BlockSpec((1, 8, 128), lambda n, lt: (0, 0, 0))
        cur_spec = pl.BlockSpec((1, Cin, L + K - 1), lambda n, lt: (n, 0, 0))

    w_spec = pl.BlockSpec((Cout, K * Cin), lambda n, lt: (0, 0))
    grid = (N, num_lt)
    cparams = pltpu.CompilerParams(
        dimension_semantics=("parallel", "parallel"),   # per-tile partial stats ⇒ no lt carry
        vmem_limit_bytes=32 * 1024 * 1024,
    )

    # ---- Pass 1: BN partial statistics only (no conv writeback to HBM) ----
    stats = pl.pallas_call(
        functools.partial(_conv_stats_kernel, K=K, T=T),
        out_shape=jax.ShapeDtypeStruct((N, num_lt, Cout, 2), jnp.float32),
        grid_spec=pltpu.PrefetchScalarGridSpec(
            num_scalar_prefetch=0,
            grid=grid,
            in_specs=[cur_spec, halo_spec, w_spec],
            out_specs=pl.BlockSpec((1, 1, Cout, 2), lambda n, lt: (n, lt, 0, 0)),
        ),
        compiler_params=cparams,
    )(xp, halo, w2)

    # Finalize BN statistics (tiny (Cout,2) reduction) and fold into one affine.
    tot = jnp.sum(stats, axis=(0, 1))                           # (Cout, 2)
    count = float(N * L)
    mean = tot[:, 0] / count
    var = jnp.maximum(tot[:, 1] / count - mean * mean, 0.0)     # biased var, clamped
    s = gamma * lax.rsqrt(var + eps)
    t = beta - mean * s
    s2 = s.reshape(Cout, 1).astype(jnp.float32)
    t2 = t.reshape(Cout, 1).astype(jnp.float32)

    # ---- Pass 2: recompute conv tile, fused BN affine + ReLU, single big write ----
    out = pl.pallas_call(
        functools.partial(_conv_bn_relu_kernel, K=K, T=T, include_relu=include_relu),
        out_shape=jax.ShapeDtypeStruct((N, Cout, L), jnp.float32),
        grid_spec=pltpu.PrefetchScalarGridSpec(
            num_scalar_prefetch=0,
            grid=grid,
            in_specs=[
                cur_spec, halo_spec, w_spec,
                pl.BlockSpec((Cout, 1), lambda n, lt: (0, 0)),
                pl.BlockSpec((Cout, 1), lambda n, lt: (0, 0)),
            ],
            out_specs=pl.BlockSpec((1, Cout, T), lambda n, lt: (n, 0, lt)),
        ),
        compiler_params=cparams,
    )(xp, halo, w2, s2, t2)
    return out


def _reference(x, weight, bias, gamma, beta, *, kernel_size, eps=1e-5):
    """Pure-JAX reference with full PyTorch semantics (incl. conv bias)."""
    K = kernel_size
    pad_left = (K - 1) // 2
    pad_right = (K - 1) - pad_left
    x_pad = jnp.pad(x, ((0, 0), (0, 0), (pad_left, pad_right)), mode="edge")
    conv = lax.conv_general_dilated(
        x_pad, weight, window_strides=(1,), padding="VALID",
        dimension_numbers=("NCH", "OIH", "NCH"),
    ) + bias[None, :, None]
    mean = jnp.mean(conv, axis=(0, 2), keepdims=True)
    var = jnp.mean((conv - mean) ** 2, axis=(0, 2), keepdims=True)
    y = (conv - mean) * lax.rsqrt(var + eps)
    y = y * gamma[None, :, None] + beta[None, :, None]
    return jnp.maximum(y, 0.0)


if __name__ == "__main__":
    # ConvBlock(n_in=4, n_out=8, kernel_size=5); L=256 exercises the tiled path.
    N, Cin, Cout, L, K = 2, 4, 8, 256, 5

    key = jax.random.PRNGKey(0)
    kx, kw, kb = jax.random.split(key, 3)

    # Round inputs/weights to bf16-representable values so the bf16 MXU path and
    # the f32 reference see identical operands (only accumulation order differs).
    x = jax.random.normal(kx, (N, Cin, L), jnp.float32)
    x = x.astype(jnp.bfloat16).astype(jnp.float32)

    fan_in = Cin * K
    bound = 1.0 / (fan_in ** 0.5)
    weight = jax.random.uniform(kw, (Cout, Cin, K), jnp.float32, -bound, bound)
    weight = weight.astype(jnp.bfloat16).astype(jnp.float32)
    bias = jax.random.uniform(kb, (Cout,), jnp.float32, -bound, bound)
    gamma = jnp.linspace(0.5, 1.5, Cout, dtype=jnp.float32)
    beta = jnp.linspace(-0.2, 0.2, Cout, dtype=jnp.float32)

    ref = _reference(x, weight, bias, gamma, beta, kernel_size=K)

    # Multi-tile path with a cross-tile halo: grid (N, 2), L_TILE=128.
    out = conv_block_pallas(x, weight, bias, gamma, beta,
                            kernel_size=K, max_l_tile=128)
    out = jax.block_until_ready(out)
    assert out.shape == (N, Cout, L)
    assert jnp.allclose(out, ref, atol=2e-3, rtol=2e-3), "mismatch (multi-tile)"

    # Default tiling (largest dividing tile: 256 -> single tile, halo-block path).
    out_d = conv_block_pallas(x, weight, bias, gamma, beta, kernel_size=K)
    out_d = jax.block_until_ready(out_d)
    assert jnp.allclose(out_d, ref, atol=2e-3, rtol=2e-3), "mismatch (default tile)"

    # Single-block fallback path (L not a multiple of 128).
    Ls = 16
    xs = x[:, :, :Ls]
    out_s = conv_block_pallas(xs, weight, bias, gamma, beta, kernel_size=K)
    out_s = jax.block_until_ready(out_s)
    ref_s = _reference(xs, weight, bias, gamma, beta, kernel_size=K)
    assert out_s.shape == (N, Cout, Ls)
    assert jnp.allclose(out_s, ref_s, atol=2e-3, rtol=2e-3), "mismatch (fallback)"

    print("KERNEL_OK")
</pallas_src>

<mosaic_0001>
module attributes {stable_mosaic.version = 11 : i64} {
  func.func @_conv_stats_kernel(%arg0: i32, %arg1: i32, %arg2: memref<1x4x128xbf16, #tpu.memory_space<vmem>>, %arg3: memref<1x4x128xbf16, #tpu.memory_space<vmem>>, %arg4: memref<8x20xbf16, #tpu.memory_space<vmem>>, %arg5: memref<1x1x8x2xf32, #tpu.memory_space<vmem>>) attributes {dimension_semantics = [#tpu.dimension_semantics<parallel>, #tpu.dimension_semantics<parallel>], iteration_bounds = array<i64: 2, 2>, scalar_prefetch = 0 : i64, scratch_operands = 0 : i64, tpu.core_type = #tpu.core_type<tc>, window_params = [{transform_indices = @transform_0, window_bounds = array<i64: 1, 4, 128>}, {transform_indices = @transform_1, window_bounds = array<i64: 1, 4, 128>}, {pipeline_mode = #tpu.pipeline_mode<synchronous>, transform_indices = @transform_2, window_bounds = array<i64: 8, 20>}, {transform_indices = @transform_3, window_bounds = array<i64: 1, 1, 8, 2>}]} {
    %c0 = arith.constant 0 : index
    %c0_0 = arith.constant 0 : index
    %c0_1 = arith.constant 0 : index
    %0 = vector.load %arg2[%c0, %c0_0, %c0_1] : memref<1x4x128xbf16, #tpu.memory_space<vmem>>, vector<1x4x128xbf16>
    %1 = vector.shape_cast %0 : vector<1x4x128xbf16> to vector<4x128xbf16>
    %c0_2 = arith.constant 0 : index
    %c0_3 = arith.constant 0 : index
    %c0_4 = arith.constant 0 : index
    %2 = vector.load %arg3[%c0_2, %c0_3, %c0_4] : memref<1x4x128xbf16, #tpu.memory_space<vmem>>, vector<1x4x128xbf16>
    %3 = vector.shape_cast %2 : vector<1x4x128xbf16> to vector<4x128xbf16>
    %4 = tpu.concatenate %1, %3 in 1 : vector<4x128xbf16>, vector<4x128xbf16> -> vector<4x256xbf16>
    %5 = vector.extract_strided_slice %4 {offsets = [0, 0], sizes = [4, 128], strides = [1, 1]} : vector<4x256xbf16> to vector<4x128xbf16>
    %6 = vector.extract_strided_slice %4 {offsets = [0, 1], sizes = [4, 128], strides = [1, 1]} : vector<4x256xbf16> to vector<4x128xbf16>
    %7 = vector.extract_strided_slice %4 {offsets = [0, 2], sizes = [4, 128], strides = [1, 1]} : vector<4x256xbf16> to vector<4x128xbf16>
    %8 = vector.extract_strided_slice %4 {offsets = [0, 3], sizes = [4, 128], strides = [1, 1]} : vector<4x256xbf16> to vector<4x128xbf16>
    %9 = vector.extract_strided_slice %4 {offsets = [0, 4], sizes = [4, 128], strides = [1, 1]} : vector<4x256xbf16> to vector<4x128xbf16>
    %10 = tpu.concatenate %5, %6, %7, %8, %9 in 0 : vector<4x128xbf16>, vector<4x128xbf16>, vector<4x128xbf16>, vector<4x128xbf16>, vector<4x128xbf16> -> vector<20x128xbf16>
    %c0_5 = arith.constant 0 : index
    %c0_6 = arith.constant 0 : index
    %11 = vector.load %arg4[%c0_5, %c0_6] : memref<8x20xbf16, #tpu.memory_space<vmem>>, vector<8x20xbf16>
    %cst = arith.constant dense<0.000000e+00> : vector<8x128xf32>
    %12 = tpu.matmul %11, %10, %cst {dimension_numbers = #tpu.dot_dimension_numbers<[1], [0], [0], [1], [0, 0, 1, 1], [], []>} : vector<8x20xbf16>, vector<20x128xbf16>, vector<8x128xf32> -> vector<8x128xf32>
    %cst_7 = arith.constant dense<0.000000e+00> : vector<8xf32>
    %13 = vector.multi_reduction <add>, %12, %cst_7 [1] : vector<8x128xf32> to vector<8xf32>
    %14 = vector.shape_cast %13 : vector<8xf32> to vector<8x1xf32>
    %15 = arith.mulf %12, %12 : vector<8x128xf32>
    %cst_8 = arith.constant dense<0.000000e+00> : vector<8xf32>
    %16 = vector.multi_reduction <add>, %15, %cst_8 [1] : vector<8x128xf32> to vector<8xf32>
    %17 = vector.shape_cast %16 : vector<8xf32> to vector<8x1xf32>
    %18 = tpu.concatenate %14, %17 in 1 : vector<8x1xf32>, vector<8x1xf32> -> vector<8x2xf32>
    %19 = vector.shape_cast %18 : vector<8x2xf32> to vector<1x1x8x2xf32>
    %c0_9 = arith.constant 0 : index
    %c0_10 = arith.constant 0 : index
    %c0_11 = arith.constant 0 : index
    %c0_12 = arith.constant 0 : index
    %20 = vector.load %arg5[%c0_9, %c0_10, %c0_11, %c0_12] : memref<1x1x8x2xf32, #tpu.memory_space<vmem>>, vector<1x1x8x2xf32>
    tpu.vector_store %arg5[%c0_9, %c0_10, %c0_11, %c0_12], %19 {strides = array<i32>} : memref<1x1x8x2xf32, #tpu.memory_space<vmem>>, vector<1x1x8x2xf32>,
    return
  }
  func.func @transform_0(%arg0: i32, %arg1: i32) -> (i32, i32, i32) {
    %c0_i32 = arith.constant 0 : i32
    %c0_i32_0 = arith.constant 0 : i32
    return %arg0, %c0_i32, %arg1 : i32, i32, i32
  }
  func.func @transform_1(%arg0: i32, %arg1: i32) -> (i32, i32, i32) {
    %c1_i32 = arith.constant 1 : i32
    %0 = arith.addi %arg1, %c1_i32 : i32
    %c1_i32_0 = arith.constant 1 : i32
    %1 = arith.muli %0, %c1_i32_0 : i32
    %c0_i32 = arith.constant 0 : i32
    %c0_i32_1 = arith.constant 0 : i32
    return %arg0, %c0_i32, %1 : i32, i32, i32
  }
  func.func @transform_2(%arg0: i32, %arg1: i32) -> (i32, i32) {
    %c0_i32 = arith.constant 0 : i32
    %c0_i32_0 = arith.constant 0 : i32
    %c0_i32_1 = arith.constant 0 : i32
    return %c0_i32, %c0_i32_0 : i32, i32
  }
  func.func @transform_3(%arg0: i32, %arg1: i32) -> (i32, i32, i32, i32) {
    %c0_i32 = arith.constant 0 : i32
    %c0_i32_0 = arith.constant 0 : i32
    %c0_i32_1 = arith.constant 0 : i32
    return %arg0, %arg1, %c0_i32, %c0_i32_0 : i32, i32, i32, i32
  }
}

</mosaic_0001>

<llo_original>
// kernel: tpu_custom_call.1
$region0: #{tpu_custom_call.1}
  #allocation0 [shape = 'u32[]', space=smem, size = 0x4, offset = 0x4, fixed_abs, tag = 'smem constant byte address 0x4 - core index']
  #allocation1 [shape = 'u32[144,128]{1,0:T(1,128)}', space=vmem, size = 0x12000, scoped, tag = 'internal scratch']
  %s0 = inlined_call_operand.hbm [shape: bf16[2,4,384], index: 0, kind: input, shape index: {}]
  %s1 = inlined_call_operand.hbm [shape: bf16[2,4,384], index: 1, kind: input, shape index: {}]
  %s2 = inlined_call_operand.vmem [shape: bf16[8,20], index: 2, kind: input, shape index: {}]
  %s3 = inlined_call_operand.vmem [shape: f32[2,2,8,2], index: 3, kind: output, shape index: {}]
  %s4 = sld [smem:[#allocation0]]
  $region53: #{tpu_custom_call.1} parent=0
    _
  %s6 = ssub.s32 1, %s4
  %s7 = scalar_select 0, %s6, %s4
  $region1: #{tpu_custom_call.1} parent=0
    #allocation2 [shape = 'u8[2048]{0}', space=vmem, size = 0x800, scoped, tag = 'input window, operand 0']
    #allocation3 [shape = 's32[2]{0}', space=sflag, size = 0x8, scoped, tag = 'scoped memory for tpu_custom_call.1']
    #allocation4 [shape = 'u8[2048]{0}', space=vmem, size = 0x800, scoped, tag = 'input window, operand 1']
    #allocation5 [shape = 's32[2]{0}', space=sflag, size = 0x8, scoped, tag = 'scoped memory for tpu_custom_call.1']
    %8 = vsyncpa [#allocation3], 0
    %s9 = scalar_lea.sflag [#allocation3], 1
    %10 = vsyncpa %s9, 0
    %11 = vsyncpa [#allocation5], 0
    %s12 = scalar_lea.sflag [#allocation5], 1
    %13 = vsyncpa %s12, 0
    loop: start=0, step=1, limit=6
    $region2: #{tpu_custom_call.1} parent=1 // loop_pre_header
      _
    $region3: #{tpu_custom_call.1} parent=1 // loop_header
      %s15 = sphi 0, %s19
      %p16 = scmp.ge.s32.totalorder %s15, 6
      %s22 = sphi 0, %s34
      %s23 = sphi 0, %s30
      %s24 = sphi 0, %s22
      %s25 = sphi 0, %s23
      %s26 = sphi 0, %s24
      %s27 = sphi 0, %s25
      %s39 = sphi 0, %s41
      %s42 = sphi 0, %s39
      %s43 = sphi 0, %s42
      %s59 = sphi 0, %s43
      %s69 = sphi 0, %s71
      %s72 = sphi 0, %s69
      %s73 = sphi 0, %s72
      %s89 = sphi 0, %s73
      %s93 = sphi 0, %s93
      %s95 = sphi 0, %s93
      %s96 = sphi 0, %s95
      %s110 = sphi 0, %s96
      %s118 = sphi 0, %s120
      %s121 = sphi 0, %s118
      %s122 = sphi 0, %s121
      %s138 = sphi 0, %s122
    $region4: #{tpu_custom_call.1} parent=1 // loop_header_branch
      %18 = sbr.rel (%p16) target = $region8
    $region5: #{tpu_custom_call.1} parent=1 // loop_body
      %s20 = ssub.s32 %s15, 1
      %s21 = ssub.s32 %s15, 2
      %s28 = sadd.s32 1, %s23
      %p29 = scmp.ge.s32.totalorder %s28, 2
      %s30 = scalar_select %p29, 0, %s28
      %s31 = sadd.s32 1, %s22
      %s32 = scalar_select %p29, %s31, %s22
      %p33 = scmp.ge.s32.totalorder %s32, 2
      %s34 = scalar_select %p33, 0, %s32
      %s35 = ssub.s32 %s22, %s34
      %s36 = ssub.s32 %s23, %s30
      %s37 = sor.u32 %s35, %s36
      %p38 = scmp.eq.s32.totalorder %s37, 0
      %s40 = sadd.s32 %s39, 1
      %s41 = scalar_select %p38, %s39, %s40
      %p44 = pneg %p38
      %p45 = scmp.eq.s32.totalorder %s15, 3
      %p46 = por %p44, %p45
      %p47 = scmp.ne.s32.totalorder %s39, %s42
      %p48 = scmp.eq.s32.totalorder %s15, 0
      %p49 = por %p47, %p48
      %p50 = scmp.ne.s32.totalorder %s39, %s42
      %p51 = scmp.eq.s32.totalorder %s20, 3
      %p52 = por %p50, %p51
      %p53 = scmp.ne.s32.totalorder %s42, %s43
      %p54 = scmp.eq.s32.totalorder %s20, 0
      %p55 = por %p53, %p54
      %p56 = scmp.ne.s32.totalorder %s42, %s43
      %p57 = scmp.eq.s32.totalorder %s21, 3
      %p58 = por %p56, %p57
      %p60 = scmp.ne.s32.totalorder %s43, %s59
      %p61 = scmp.eq.s32.totalorder %s21, 0
      %p62 = por %p60, %p61
      %s63 = sadd.s32 %s23, 1
      %s64 = sadd.s32 %s30, 1
      %s65 = ssub.s32 %s22, %s34
      %s66 = ssub.s32 %s63, %s64
      %s67 = sor.u32 %s65, %s66
      %p68 = scmp.eq.s32.totalorder %s67, 0
      %s70 = sadd.s32 %s69, 1
      %s71 = scalar_select %p68, %s69, %s70
      %p74 = pneg %p68
      %p75 = scmp.eq.s32.totalorder %s15, 3
      %p76 = por %p74, %p75
      %p77 = scmp.ne.s32.totalorder %s69, %s72
      %p78 = scmp.eq.s32.totalorder %s15, 0
      %p79 = por %p77, %p78
      %p80 = scmp.ne.s32.totalorder %s69, %s72
      %p81 = scmp.eq.s32.totalorder %s20, 3
      %p82 = por %p80, %p81
      %p83 = scmp.ne.s32.totalorder %s72, %s73
      %p84 = scmp.eq.s32.totalorder %s20, 0
      %p85 = por %p83, %p84
      %p86 = scmp.ne.s32.totalorder %s72, %s73
      %p87 = scmp.eq.s32.totalorder %s21, 3
      %p88 = por %p86, %p87
      %p90 = scmp.ne.s32.totalorder %s73, %s89
      %p91 = scmp.eq.s32.totalorder %s21, 0
      %p92 = por %p90, %p91
      %s94 = sadd.s32 %s93, 1
      %p97 = scmp.eq.s32.totalorder %s15, 3
      %p98 = scmp.ne.s32.totalorder %s93, %s95
      %p99 = scmp.eq.s32.totalorder %s15, 0
      %p100 = por %p98, %p99
      %p101 = scmp.ne.s32.totalorder %s93, %s95
      %p102 = scmp.eq.s32.totalorder %s20, 3
      %p103 = por %p101, %p102
      %p104 = scmp.ne.s32.totalorder %s95, %s96
      %p105 = scmp.eq.s32.totalorder %s20, 0
      %p106 = por %p104, %p105
      %p107 = scmp.ne.s32.totalorder %s95, %s96
      %p108 = scmp.eq.s32.totalorder %s21, 3
      %p109 = por %p107, %p108
      %p111 = scmp.ne.s32.totalorder %s96, %s110
      %p112 = scmp.eq.s32.totalorder %s21, 0
      %p113 = por %p111, %p112
      %s114 = ssub.s32 %s22, %s34
      %s115 = ssub.s32 %s23, %s30
      %s116 = sor.u32 %s114, %s115
      %p117 = scmp.eq.s32.totalorder %s116, 0
      %s119 = sadd.s32 %s118, 1
      %s120 = scalar_select %p117, %s118, %s119
      %p123 = pneg %p117
      %p124 = scmp.eq.s32.totalorder %s15, 3
      %p125 = por %p123, %p124
      %p126 = scmp.ne.s32.totalorder %s118, %s121
      %p127 = scmp.eq.s32.totalorder %s15, 0
      %p128 = por %p126, %p127
      %p129 = scmp.ne.s32.totalorder %s118, %s121
      %p130 = scmp.eq.s32.totalorder %s20, 3
      %p131 = por %p129, %p130
      %p132 = scmp.ne.s32.totalorder %s121, %s122
      %p133 = scmp.eq.s32.totalorder %s20, 0
      %p134 = por %p132, %p133
      %p135 = scmp.ne.s32.totalorder %s121, %s122
      %p136 = scmp.eq.s32.totalorder %s21, 3
      %p137 = por %p135, %p136
      %p139 = scmp.ne.s32.totalorder %s122, %s138
      %p140 = scmp.eq.s32.totalorder %s21, 0
      %p141 = por %p139, %p140
      %p142 = scmp.le.s32.totalorder 1, %s15
      %p143 = scmp.lt.s32.totalorder %s15, 5
      %p144 = pnand %p142, %p143
      %p145 = pneg %p144
      // Predicated region
      $region9: #{tpu_custom_call.1} parent=5 // pred_check
        _
      $region10: #{tpu_custom_call.1} parent=5 // pred_check_branch
        %147 = sbr.rel (%p144) target = $region12
      $region11: #{tpu_custom_call.1} parent=5 // pred_region
        %s148 = ssub.s32 %s15, 1
        // Predicated region
        $region13: #{tpu_custom_call.1} parent=11 // pred_check
          %p149 = pneg %p106
        $region14: #{tpu_custom_call.1} parent=11 // pred_check_branch
          %151 = sbr.rel (%p149) target = $region16
        $region15: #{tpu_custom_call.1} parent=11 // pred_region
          _
        $region16: #{tpu_custom_call.1} parent=11 // pred_fallthru
          _
      $region12: #{tpu_custom_call.1} parent=5 // pred_fallthru
        _
      %p152 = scmp.lt.s32.totalorder %s15, 4
      // Predicated region
      $region17: #{tpu_custom_call.1} parent=5 // pred_check
        %p153 = pneg %p152
      $region18: #{tpu_custom_call.1} parent=5 // pred_check_branch
        %155 = sbr.rel (%p153) target = $region20
      $region19: #{tpu_custom_call.1} parent=5 // pred_region
        // Predicated region
        $region21: #{tpu_custom_call.1} parent=19 // pred_check
          %p156 = pneg %p49
        $region22: #{tpu_custom_call.1} parent=19 // pred_check_branch
          %158 = sbr.rel (%p156) target = $region24
        $region23: #{tpu_custom_call.1} parent=19 // pred_region
          %s159 = sand.u32 %s39, 1
          %s160 = scalar_lea.sflag [#allocation3], %s159
          %s161 = sand.u32 %s39, 1
          %s162 = smul.addr %s161, 2
          %s163 = scalar_lea.vmem [#allocation2], %s162
          %s165 = ssub.s32 32, 32
          %166 = vsyncadd %s160, %s165
          %s167 = smul.addr %s22, 3
          %s168 = sadd.s32 %s23, %s167
          %s169 = smul.addr %s168, 32
          %s170 = scalar_lea.hbm %s0, %s169
          %s172 = sshll.u32 %s163, 4
          %s173 = int_to_ptr.vmem [resolvable:$true] %s172
          %175 = dma.hbm_to_vmem [thread:$0]  %s170, 32, %s173, %s160
        $region24: #{tpu_custom_call.1} parent=19 // pred_fallthru
          _
        // Predicated region
        $region25: #{tpu_custom_call.1} parent=19 // pred_check
          %p176 = pneg %p79
        $region26: #{tpu_custom_call.1} parent=19 // pred_check_branch
          %178 = sbr.rel (%p176) target = $region28
        $region27: #{tpu_custom_call.1} parent=19 // pred_region
          %s179 = sand.u32 %s69, 1
          %s180 = scalar_lea.sflag [#allocation5], %s179
          %s181 = sand.u32 %s69, 1
          %s182 = smul.addr %s181, 2
          %s183 = scalar_lea.vmem [#allocation4], %s182
          %s184 = sadd.s32 %s23, 1
          %s186 = ssub.s32 32, 32
          %187 = vsyncadd %s180, %s186
          %s188 = smul.addr %s22, 3
          %s189 = sadd.s32 %s184, %s188
          %s190 = smul.addr %s189, 32
          %s191 = scalar_lea.hbm %s1, %s190
          %s193 = sshll.u32 %s183, 4
          %s194 = int_to_ptr.vmem [resolvable:$true] %s193
          %196 = dma.hbm_to_vmem [thread:$0]  %s191, 32, %s194, %s180
        $region28: #{tpu_custom_call.1} parent=19 // pred_fallthru
          _
      $region20: #{tpu_custom_call.1} parent=5 // pred_fallthru
        _
      %p197 = scmp.le.s32.totalorder 1, %s15
      %p198 = scmp.lt.s32.totalorder %s15, 5
      %p199 = pnand %p197, %p198
      %p200 = pneg %p199
      // Predicated region
      $region29: #{tpu_custom_call.1} parent=5 // pred_check
        _
      $region30: #{tpu_custom_call.1} parent=5 // pred_check_branch
        %202 = sbr.rel (%p199) target = $region32
      $region31: #{tpu_custom_call.1} parent=5 // pred_region
        %s203 = ssub.s32 %s15, 1
        %s204 = sand.u32 %s42, 1
        %s205 = scalar_lea.sflag [#allocation3], %s204
        %s206 = sand.u32 %s42, 1
        %s207 = smul.addr %s206, 2
        %s208 = scalar_lea.vmem [#allocation2], %s207
        // Predicated region
        $region33: #{tpu_custom_call.1} parent=31 // pred_check
          %p209 = pneg %p55
        $region34: #{tpu_custom_call.1} parent=31 // pred_check_branch
          %211 = sbr.rel (%p209) target = $region36
        $region35: #{tpu_custom_call.1} parent=31 // pred_region
          %212 = dma.done %s205, 32
        $region36: #{tpu_custom_call.1} parent=31 // pred_fallthru
          _
        %s213 = sand.u32 %s72, 1
        %s214 = scalar_lea.sflag [#allocation5], %s213
        %s215 = sand.u32 %s72, 1
        %s216 = smul.addr %s215, 2
        %s217 = scalar_lea.vmem [#allocation4], %s216
        // Predicated region
        $region37: #{tpu_custom_call.1} parent=31 // pred_check
          %p218 = pneg %p85
        $region38: #{tpu_custom_call.1} parent=31 // pred_check_branch
          %220 = sbr.rel (%p218) target = $region40
        $region39: #{tpu_custom_call.1} parent=31 // pred_region
          %221 = dma.done %s214, 32
        $region40: #{tpu_custom_call.1} parent=31 // pred_fallthru
          _
        %s222 = sand.u32 %s42, 1
        %s223 = scalar_lea.sflag [#allocation3], %s222
        %s224 = sand.u32 %s42, 1
        %s225 = smul.addr %s224, 2
        %s226 = scalar_lea.vmem [#allocation2], %s225
        %p227 = pneg %p55
        %p228 = pneg %p52
        %s229 = sand.u32 %s72, 1
        %s230 = scalar_lea.sflag [#allocation5], %s229
        %s231 = sand.u32 %s72, 1
        %s232 = smul.addr %s231, 2
        %s233 = scalar_lea.vmem [#allocation4], %s232
        %p234 = pneg %p85
        %p235 = pneg %p82
        %p236 = pneg %p106
        %p237 = pneg %p103
        %p238 = pneg %p134
        %p239 = pneg %p131
        %p240 = scmp.lt.s32.totalorder %s24, 1
        %s241 = scalar_select %p240, %s24, 1
        %p242 = scmp.lt.s32.totalorder %s25, 1
        %s243 = scalar_select %p242, %s25, 1
        %s244 = smul.addr %s241, 2
        %s245 = sadd.s32 %s243, %s244
        %s246 = smul.addr %s245, 8
        %s247 = scalar_lea.vmem %s3, %s246
        %s248 = sadd.s32 %s25, 1
        %p249 = scmp.lt.s32.totalorder %s24, 1
        %s250 = scalar_select %p249, %s24, 1
        %p251 = scmp.lt.s32.totalorder %s25, 1
        %s252 = scalar_select %p251, %s25, 1
        %s253 = smul.addr %s250, 2
        %s254 = sadd.s32 %s252, %s253
        %s255 = smul.addr %s254, 8
        %s256 = scalar_lea.vmem %s3, %s255
        %v258 = vld [vmem:[%s208] sm:$0x3]
        %v259 = vld [vmem:[%s217] sm:$0x3]
        %v262 = vrot.slane %v258, 6
        %v263 = vrot.slane %v259, 6
        %264 = vrot.lane.b32.xlu0 %v262, 127
        %v265 = vpop.permute.xlu0 %264
        %266 = vrot.lane.b32.xlu0 %v263, 127
        %v267 = vpop.permute.xlu0 %266
        %vm268 = vcmask 1039360
        %v269 = vsel %vm268, %v265, %v267
        %v270 = vrot.slane %v258, 4
        %v271 = vrot.slane %v259, 4
        %272 = vrot.lane.b32.xlu0 %v270, 126
        %v273 = vpop.permute.xlu0 %272
        %274 = vrot.lane.b32.xlu0 %v271, 126
        %v275 = vpop.permute.xlu0 %274
        %vm276 = vcmask 1031168
        %v277 = vsel %vm276, %v273, %v275
        %v278 = vrot.slane %v258, 2
        %v279 = vrot.slane %v259, 2
        %280 = vrot.lane.b32.xlu0 %v278, 125
        %v281 = vpop.permute.xlu0 %280
        %282 = vrot.lane.b32.xlu0 %v279, 125
        %v283 = vpop.permute.xlu0 %282
        %vm284 = vcmask 1022976
        %v285 = vsel %vm284, %v281, %v283
        %286 = vrot.lane.b32.xlu0 %v258, 124
        %v287 = vpop.permute.xlu0 %286
        %288 = vrot.lane.b32.xlu0 %v259, 124
        %v289 = vpop.permute.xlu0 %288
        %vm290 = vcmask 1014784
        %v291 = vsel %vm290, %v287, %v289
        %vm292 = vcmask 1041408
        %v295 = vsel %vm292, %v258, %v269
        %vm296 = vcmask 1043456
        %v298 = vsel %vm296, %v295, %v277
        %vm299 = vcmask 1045504
        %v301 = vsel %vm299, %v298, %v285
        %v303 = vld [vmem:[%s2] sm:$0xf]
        %vm304 = vcmask 162816
        %v306 = vsel %vm304, %v303, 0
        %v309 = vsel %vm292, %v291, 0
        %311 = vmatprep.subr.bf16.mxu0 0
        %312 = vmatpush1.bf16.msra.mxu0 %v301
        %313 = vmatprep.subr.bf16.mxu0 0
        %314 = vmatpush1.bf16.msra.mxu0 %v309
        %315 = vmatprep.subr.bf16.mxu0 0
        %316 = vmatpush1.bf16.msra.mxu0 0
        %317 = vmatprep.subr.bf16.mxu0 0
        %318 = vmatpush1.bf16.msra.mxu0 0
        %319 = vmatprep.subr.bf16.mxu0 0
        %320 = vmatpush1.bf16.msra.mxu0 0
        %321 = vmatprep.subr.bf16.mxu0 0
        %322 = vmatpush1.bf16.msra.mxu0 0
        %323 = vmatprep.subr.bf16.mxu0 0
        %324 = vmatpush1.bf16.msra.mxu0 0
        %325 = vmatprep.subr.bf16.mxu0 0
        %326 = vmatpush1.bf16.msra.mxu0 0
        %327 = vmatprep.subr.bf16.mxu0 0
        %328 = vmatpush1.bf16.msra.mxu0 0
        %329 = vmatprep.subr.bf16.mxu0 0
        %330 = vmatpush1.bf16.msra.mxu0 0
        %331 = vmatprep.subr.bf16.mxu0 0
        %332 = vmatpush1.bf16.msra.mxu0 0
        %333 = vmatprep.subr.bf16.mxu0 0
        %334 = vmatpush1.bf16.msra.mxu0 0
        %335 = vmatprep.subr.bf16.mxu0 0
        %336 = vmatpush1.bf16.msra.mxu0 0
        %337 = vmatprep.subr.bf16.mxu0 0
        %338 = vmatpush1.bf16.msra.mxu0 0
        %339 = vmatprep.subr.bf16.mxu0 0
        %340 = vmatpush1.bf16.msra.mxu0 0
        %341 = vmatprep.subr.bf16.mxu0 0
        %342 = vmatpush1.bf16.msra.mxu0 0
        %343 = vmatprep.mubr.bf16.mxu0 0
        %344 = vmatmul.mubr.bf16.gmra.mrb[0].mxu0 %v306
        %v345 = vpop.f32.mrb[0].mxu0
        %v346 = vadd.f32 0.0, %v345
        %v347 = vpop.f32.mrb[0].mxu0
        %v348 = vpop.f32.mrb[0].mxu0
        %v349 = vpop.f32.mrb[0].mxu0
        %350 = vdwg.mxu0
        %351 = vadd.xlane.f32.xlu0 %v346
        %v352 = vpop.xlane.xlu0 %351
        %v353 = vmul.f32 %v346, %v346
        %354 = vadd.xlane.f32.xlu0 %v353
        %v355 = vpop.xlane.xlu0 %354
        %vm356 = vcmask 7168
        %v357 = vsel %vm356, %v352, %v355
        %vm358 = vcmask 15360
        %359 = vst.msk [vmem:[%s256] sm:$0xff] %vm358, %v357
        %p360 = scmp.lt.s32.totalorder %s24, 1
        %s361 = scalar_select %p360, %s24, 1
        %p362 = scmp.lt.s32.totalorder %s25, 1
        %s363 = scalar_select %p362, %s25, 1
        %s364 = smul.addr %s361, 2
        %s365 = sadd.s32 %s363, %s364
        %s366 = smul.addr %s365, 8
        %s367 = scalar_lea.vmem %s3, %s366
        // Predicated region
        $region41: #{tpu_custom_call.1} parent=31 // pred_check
          %p368 = pneg %p131
        $region42: #{tpu_custom_call.1} parent=31 // pred_check_branch
          %370 = sbr.rel (%p368) target = $region44
        $region43: #{tpu_custom_call.1} parent=31 // pred_region
          _
        $region44: #{tpu_custom_call.1} parent=31 // pred_fallthru
          _
      $region32: #{tpu_custom_call.1} parent=5 // pred_fallthru
        _
      %p371 = scmp.le.s32.totalorder 2, %s15
      // Predicated region
      $region45: #{tpu_custom_call.1} parent=5 // pred_check
        %p372 = pneg %p371
      $region46: #{tpu_custom_call.1} parent=5 // pred_check_branch
        %374 = sbr.rel (%p372) target = $region48
      $region47: #{tpu_custom_call.1} parent=5 // pred_region
        %s375 = ssub.s32 %s15, 2
        // Predicated region
        $region49: #{tpu_custom_call.1} parent=47 // pred_check
          %p376 = pneg %p137
        $region50: #{tpu_custom_call.1} parent=47 // pred_check_branch
          %378 = sbr.rel (%p376) target = $region52
        $region51: #{tpu_custom_call.1} parent=47 // pred_region
          %p379 = scmp.lt.s32.totalorder %s26, 1
          %s380 = scalar_select %p379, %s26, 1
          %p381 = scmp.lt.s32.totalorder %s27, 1
          %s382 = scalar_select %p381, %s27, 1
          %s383 = smul.addr %s380, 2
          %s384 = sadd.s32 %s382, %s383
          %s385 = smul.addr %s384, 8
          %s386 = scalar_lea.vmem %s3, %s385
        $region52: #{tpu_custom_call.1} parent=47 // pred_fallthru
          _
      $region48: #{tpu_custom_call.1} parent=5 // pred_fallthru
        _
    $region6: #{tpu_custom_call.1} parent=1 // loop_footer
      %s19 = sadd.s32 1, %s15
    $region7: #{tpu_custom_call.1} parent=1 // loop_footer_branch
      %14 = sbr.rel target = $region3
    $region8: #{tpu_custom_call.1} parent=1 // loop_exit
      _
    %387 = vsyncpa [#allocation3], 1
    %s388 = scalar_lea.sflag [#allocation3], 1
    %389 = vsyncpa %s388, 1
    %390 = vsyncpa [#allocation5], 1
    %s391 = scalar_lea.sflag [#allocation5], 1
    %392 = vsyncpa %s391, 1

</llo_original>
